<compile_context>
chip_gen: v6e
topology: v6e:2x2x1
jax: 0.10.0
libtpu: 0.0.40
codegen_flags: <defaults>
</compile_context>

<pallas_src>
import functools

import jax
import jax.numpy as jnp
from jax.experimental import pallas as pl
from jax.experimental.pallas import tpu as pltpu


def _focal_loss_kernel(pred_ref, tgt_ref, part_ref, *, n_rows, row_tile,
                       alpha, gamma, hard_targets):
    i = pl.program_id(0)

    p = pred_ref[...].astype(jnp.float32)
    t = tgt_ref[...].astype(jnp.float32)

    if hard_targets:
        # Targets known to be exactly 0/1: one log per element, no exp.
        # (Differs from the reference only when p underflows below e^-100.)
        pt = t * p + (1.0 - t) * (1.0 - p)
        bce = -jnp.maximum(jnp.log(pt), jnp.float32(-100.0))
    else:
        # BCELoss with PyTorch's log clamp at -100 (soft targets supported).
        log_p = jnp.maximum(jnp.log(p), jnp.float32(-100.0))
        log_1mp = jnp.maximum(jnp.log(1.0 - p), jnp.float32(-100.0))
        bce = -(t * log_p + (1.0 - t) * log_1mp)
        pt = jnp.exp(-bce)

    w = 1.0 - pt
    g = float(gamma)
    if g == 0.0:
        mod = jnp.ones_like(w)              # avoids 0**0 -> NaN from pow lowering
    elif g == 0.5:
        mod = jnp.sqrt(w)
    elif g.is_integer() and 1.0 <= g <= 8.0:
        # Repeated multiplies (VPU) instead of exp+log pow (EUP).
        k = int(g)
        mod = None
        base = w
        while k:
            if k & 1:
                mod = base if mod is None else mod * base
            k >>= 1
            if k:
                base = base * base
    else:
        mod = w ** jnp.float32(g)
    focal = jnp.float32(alpha) * mod * bce

    if n_rows % row_tile != 0:
        # Only the trailing block has out-of-bounds (garbage) rows.  A (rt, 1)
        # row mask + one select discards any NaN/Inf they produced (select, not
        # multiply, so NaN cannot propagate into the partial sums).
        row_ids = jax.lax.broadcasted_iota(jnp.int32, (row_tile, 1), 0) + i * row_tile
        focal = jnp.where(row_ids < n_rows, focal, jnp.float32(0.0))

    # (rt, C) -> (rt//8, 8, C); summing the leading axis is pure vreg-wise VPU
    # adds — no per-step XLU cross-lane reduce, no SMEM scalar serialization.
    c = focal.shape[-1]
    part_ref[...] = focal.reshape(row_tile // 8, 8, c).sum(axis=0)


def _round_up(x, m):
    return ((x + m - 1) // m) * m


def _pick_width(n, c):
    """Lane-dense 2D view width; None means keep the original (N, C) layout."""
    total = n * c
    if total % 128 != 0:
        return None
    # Prefer the widest lane-dense view that still leaves >= 8 rows (so the
    # sublane block never exceeds the array); otherwise take what divides.
    for cand in (1024, 512, 256, 128):
        if total % cand == 0 and total // cand >= 8:
            return cand
    for cand in (1024, 512, 256, 128):
        if total % cand == 0:
            return cand
    return None


def _pick_row_tile(rows, width, in_bytes_per_elem):
    # VMEM per element: 2 pipeline buffers x (pred + target) itemsizes plus
    # ~5 live f32 temporaries (log_p, log_1mp, bce, pt, focal).  Output partial
    # blocks are tiny (2 x 8 x W x 4 B) and ignored.
    per_elem = 2 * in_bytes_per_elem + 20
    budget = 36 * 1024 * 1024                 # working set under the 48 MiB limit
    rt = max(8, (budget // per_elem // max(width, 1)) // 8 * 8)
    # Keep >= ~8 grid steps when the input is big enough: preserves DMA/compute
    # overlap (double buffering) and lets v7x shard the axis across both TCs.
    rt = min(rt, _round_up(max(1, -(-rows // 8)), 8))
    rt = min(rt, _round_up(rows, 8))          # never bigger than padded array
    return max(8, rt)


def focal_loss(pred, target, *, alpha=0.25, gamma=2.0, reduction="mean",
               hard_targets=False):
    """pred, target: [N, C] arrays with pred in (0, 1).  Returns a scalar loss.

    Any float pred dtype and float/int target dtype are accepted; all math is
    done in f32 inside VMEM.  If upstream already produces bf16 pred or
    int8/bf16 0-1 targets, pass them directly (the kernel is HBM-bound, so
    halving the input streams is a near-proportional win); do NOT pre-cast
    here.  hard_targets=True enables a faster path valid for exact 0/1 targets.
    """
    assert pred.shape == target.shape and pred.ndim == 2
    if reduction not in ("mean", "sum"):
        # TODO(synk): reduction='none' (full [N, C] per-element output) not implemented.
        raise NotImplementedError("reduction must be 'mean' or 'sum'")

    n, c = pred.shape
    width = _pick_width(n, c)
    if width is not None:
        rows = (n * c) // width
        pred_v = pred.reshape(rows, width)      # free, contiguous row-major view
        tgt_v = target.reshape(rows, width)
    else:
        rows, width = n, c
        pred_v, tgt_v = pred, target

    in_bytes = jnp.dtype(pred.dtype).itemsize + jnp.dtype(target.dtype).itemsize
    rt = _pick_row_tile(rows, width, in_bytes)
    num_tiles = -(-rows // rt)

    kernel = functools.partial(
        _focal_loss_kernel, n_rows=rows, row_tile=rt,
        alpha=float(alpha), gamma=float(gamma), hard_targets=hard_targets)

    partials = pl.pallas_call(
        kernel,
        out_shape=jax.ShapeDtypeStruct((num_tiles * 8, width), jnp.float32),
        grid_spec=pltpu.PrefetchScalarGridSpec(
            num_scalar_prefetch=0,
            grid=(num_tiles,),
            in_specs=[
                pl.BlockSpec((rt, width), lambda i: (i, 0)),
                pl.BlockSpec((rt, width), lambda i: (i, 0)),
            ],
            out_specs=pl.BlockSpec((8, width), lambda i: (i, 0)),
        ),
        compiler_params=pltpu.CompilerParams(
            # Each grid step writes its own partial block: fully parallel, so
            # v7x can shard the axis across both TensorCores.
            dimension_semantics=("parallel",),
            # Explicit limit: safe on v7x (64 MiB/TC physical) and well under
            # v5e/v6e's 128 MiB; avoids tripping the 16/32 MiB scoped defaults.
            vmem_limit_bytes=48 * 1024 * 1024,
        ),
    )(pred_v, tgt_v)

    total = jnp.sum(partials, dtype=jnp.float32)
    if reduction == "mean":
        return total / jnp.float32(n * c)
    return total


def focal_loss_ref(pred, target, alpha=0.25, gamma=2.0, reduction="mean"):
    """Pure-JAX reference mirroring torch.nn.BCELoss + focal weighting."""
    p = pred.astype(jnp.float32)
    t = target.astype(jnp.float32)
    log_p = jnp.maximum(jnp.log(p), -100.0)
    log_1mp = jnp.maximum(jnp.log(1.0 - p), -100.0)
    bce = -(t * log_p + (1.0 - t) * log_1mp)
    pt = jnp.exp(-bce)
    focal = alpha * (1.0 - pt) ** gamma * bce
    return focal.mean() if reduction == "mean" else focal.sum()


if __name__ == "__main__":
    key = jax.random.PRNGKey(0)
    k1, k2, k3, k4, k5, k6 = jax.random.split(key, 6)

    # (batch, num_constraints): sigmoid-probability predictions, imbalanced targets.
    n, c = 32, 128
    pred = jax.nn.sigmoid(jax.random.normal(k1, (n, c), dtype=jnp.float32))
    target = (jax.random.uniform(k2, (n, c)) < 0.1).astype(jnp.float32)

    out = jax.block_until_ready(focal_loss(pred, target))
    ref = jax.block_until_ready(focal_loss_ref(pred, target))
    assert jnp.allclose(out, ref, rtol=1e-5, atol=1e-6), (out, ref)

    # Hard-target fast path (targets are exactly 0/1) and integer-gamma path.
    out_h = jax.block_until_ready(focal_loss(pred, target, hard_targets=True))
    assert jnp.allclose(out_h, ref, rtol=1e-5, atol=1e-6), (out_h, ref)
    out_g3 = jax.block_until_ready(focal_loss(pred, target, gamma=3.0))
    ref_g3 = jax.block_until_ready(focal_loss_ref(pred, target, gamma=3.0))
    assert jnp.allclose(out_g3, ref_g3, rtol=1e-5, atol=1e-6), (out_g3, ref_g3)

    # Multi-tile grid + ragged last tile on the lane-dense flattened view.
    n2, c2 = 20, 256
    pred2 = jax.nn.sigmoid(jax.random.normal(k3, (n2, c2), dtype=jnp.float32))
    target2 = (jax.random.uniform(k4, (n2, c2)) < 0.1).astype(jnp.float32)
    out2 = jax.block_until_ready(focal_loss(pred2, target2, reduction="sum"))
    ref2 = jax.block_until_ready(focal_loss_ref(pred2, target2, reduction="sum"))
    assert jnp.allclose(out2, ref2, rtol=1e-5, atol=1e-5), (out2, ref2)

    # Odd C (not a 128 multiple, total not a 128 multiple) -> fallback layout.
    n3, c3 = 12, 50
    pred3 = jax.nn.sigmoid(jax.random.normal(k5, (n3, c3), dtype=jnp.float32))
    target3 = (jax.random.uniform(k6, (n3, c3)) < 0.1).astype(jnp.float32)
    out3 = jax.block_until_ready(focal_loss(pred3, target3))
    ref3 = jax.block_until_ready(focal_loss_ref(pred3, target3))
    assert jnp.allclose(out3, ref3, rtol=1e-5, atol=1e-6), (out3, ref3)

    print("KERNEL_OK")
</pallas_src>

<mosaic_0001>
module attributes {stable_mosaic.version = 11 : i64} {
  func.func @_focal_loss_kernel(%arg0: i32, %arg1: memref<8x512xf32, #tpu.memory_space<vmem>>, %arg2: memref<8x512xf32, #tpu.memory_space<vmem>>, %arg3: memref<8x512xf32, #tpu.memory_space<vmem>>) attributes {dimension_semantics = [#tpu.dimension_semantics<parallel>], iteration_bounds = array<i64: 1>, scalar_prefetch = 0 : i64, scratch_operands = 0 : i64, tpu.core_type = #tpu.core_type<tc>, window_params = [{transform_indices = @transform_0, window_bounds = array<i64: 8, 512>}, {transform_indices = @transform_1, window_bounds = array<i64: 8, 512>}, {transform_indices = @transform_2, window_bounds = array<i64: 8, 512>}]} {
    %c0 = arith.constant 0 : index
    %c0_0 = arith.constant 0 : index
    %0 = vector.load %arg1[%c0, %c0_0] : memref<8x512xf32, #tpu.memory_space<vmem>>, vector<8x512xf32>
    %c0_1 = arith.constant 0 : index
    %c0_2 = arith.constant 0 : index
    %1 = vector.load %arg2[%c0_1, %c0_2] : memref<8x512xf32, #tpu.memory_space<vmem>>, vector<8x512xf32>
    %2 = math.log %0 : vector<8x512xf32>
    %cst = arith.constant -1.000000e+02 : f32
    %3 = vector.broadcast %cst : f32 to vector<8x512xf32>
    %4 = arith.maximumf %2, %3 : vector<8x512xf32>
    %cst_3 = arith.constant 1.000000e+00 : f32
    %5 = vector.broadcast %cst_3 : f32 to vector<8x512xf32>
    %6 = arith.subf %5, %0 : vector<8x512xf32>
    %7 = math.log %6 : vector<8x512xf32>
    %cst_4 = arith.constant -1.000000e+02 : f32
    %8 = vector.broadcast %cst_4 : f32 to vector<8x512xf32>
    %9 = arith.maximumf %7, %8 : vector<8x512xf32>
    %10 = arith.mulf %1, %4 : vector<8x512xf32>
    %cst_5 = arith.constant 1.000000e+00 : f32
    %11 = vector.broadcast %cst_5 : f32 to vector<8x512xf32>
    %12 = arith.subf %11, %1 : vector<8x512xf32>
    %13 = arith.mulf %12, %9 : vector<8x512xf32>
    %14 = arith.addf %10, %13 : vector<8x512xf32>
    %cst_6 = arith.constant 0.000000e+00 : f32
    %15 = vector.broadcast %cst_6 : f32 to vector<8x512xf32>
    %16 = arith.subf %15, %14 : vector<8x512xf32>
    %cst_7 = arith.constant 0.000000e+00 : f32
    %17 = vector.broadcast %cst_7 : f32 to vector<8x512xf32>
    %18 = arith.subf %17, %16 : vector<8x512xf32>
    %19 = math.exp %18 : vector<8x512xf32>
    %cst_8 = arith.constant 1.000000e+00 : f32
    %20 = vector.broadcast %cst_8 : f32 to vector<8x512xf32>
    %21 = arith.subf %20, %19 : vector<8x512xf32>
    %22 = arith.mulf %21, %21 : vector<8x512xf32>
    %cst_9 = arith.constant 2.500000e-01 : f32
    %23 = vector.broadcast %cst_9 : f32 to vector<8x512xf32>
    %24 = arith.mulf %23, %22 : vector<8x512xf32>
    %25 = arith.mulf %24, %16 : vector<8x512xf32>
    %26 = vector.shape_cast %25 : vector<8x512xf32> to vector<1x8x512xf32>
    %cst_10 = arith.constant dense<0.000000e+00> : vector<8x512xf32>
    %27 = vector.multi_reduction <add>, %26, %cst_10 [0] : vector<1x8x512xf32> to vector<8x512xf32>
    %c0_11 = arith.constant 0 : index
    %c0_12 = arith.constant 0 : index
    %28 = vector.load %arg3[%c0_11, %c0_12] : memref<8x512xf32, #tpu.memory_space<vmem>>, vector<8x512xf32>
    tpu.vector_store %arg3[%c0_11, %c0_12], %27 {strides = array<i32>} : memref<8x512xf32, #tpu.memory_space<vmem>>, vector<8x512xf32>,
    return
  }
  func.func @transform_0(%arg0: i32) -> (i32, i32) {
    %c0_i32 = arith.constant 0 : i32
    %c0_i32_0 = arith.constant 0 : i32
    return %arg0, %c0_i32 : i32, i32
  }
  func.func @transform_1(%arg0: i32) -> (i32, i32) {
    %c0_i32 = arith.constant 0 : i32
    %c0_i32_0 = arith.constant 0 : i32
    return %arg0, %c0_i32 : i32, i32
  }
  func.func @transform_2(%arg0: i32) -> (i32, i32) {
    %c0_i32 = arith.constant 0 : i32
    %c0_i32_0 = arith.constant 0 : i32
    return %arg0, %c0_i32 : i32, i32
  }
}

</mosaic_0001>

<llo_original>
// kernel: tpu_custom_call.1
$region0: #{tpu_custom_call.1}
  #allocation0 [shape = 'u32[]', space=smem, size = 0x4, offset = 0x4, fixed_abs, tag = 'smem constant byte address 0x4 - core index']
  #allocation1 [shape = 'u32[144,128]{1,0:T(1,128)}', space=vmem, size = 0x12000, scoped, tag = 'internal scratch']
  %s0 = inlined_call_operand.hbm [shape: f32[8,512], index: 0, kind: input, shape index: {}]
  %s1 = inlined_call_operand.hbm [shape: f32[8,512], index: 1, kind: input, shape index: {}]
  %s2 = inlined_call_operand.hbm [shape: f32[8,512], index: 2, kind: output, shape index: {}]
  %s3 = sld [smem:[#allocation0]]
  $region26: #{tpu_custom_call.1} parent=0
    _
  %s5 = ssub.s32 1, %s3
  %s6 = scalar_select 0, %s5, %s3
  $region1: #{tpu_custom_call.1} parent=0
    #allocation2 [shape = 'u8[16384]{0}', space=vmem, size = 0x4000, scoped, tag = 'input window, operand 0, single buffered']
    #allocation3 [shape = 's32[1]{0}', space=sflag, size = 0x4, scoped, tag = 'scoped memory for tpu_custom_call.1']
    #allocation4 [shape = 's32[1]{0}', space=sflag, size = 0x4, scoped, tag = 'scoped memory for tpu_custom_call.1']
    #allocation5 [shape = 'u8[16384]{0}', space=vmem, size = 0x4000, scoped, tag = 'input window, operand 1, single buffered']
    #allocation6 [shape = 's32[1]{0}', space=sflag, size = 0x4, scoped, tag = 'scoped memory for tpu_custom_call.1']
    #allocation7 [shape = 'u8[16384]{0}', space=vmem, size = 0x4000, scoped, tag = 'output window, operand 0, single buffered']
    %7 = vsyncpa [#allocation3], 0
    %8 = vsyncpa [#allocation6], 0
    %9 = vsyncpa [#allocation4], 0
    // Predicated region
    $region2: #{tpu_custom_call.1} parent=1 // pred_check
      _
    $region3: #{tpu_custom_call.1} parent=1 // pred_check_branch
      %11 = sbr.rel (0) target = $region5
    $region4: #{tpu_custom_call.1} parent=1 // pred_region
      %s13 = ssub.s32 512, 512
      %14 = vsyncadd [#allocation3], %s13
      %s16 = sshll.u32 [#allocation2], 4
      %s17 = int_to_ptr.vmem [resolvable:$true] %s16
      %19 = dma.hbm_to_vmem [thread:$0]  %s0, 512, %s17, [#allocation3]
    $region5: #{tpu_custom_call.1} parent=1 // pred_fallthru
      _
    // Predicated region
    $region6: #{tpu_custom_call.1} parent=1 // pred_check
      _
    $region7: #{tpu_custom_call.1} parent=1 // pred_check_branch
      %21 = sbr.rel (0) target = $region9
    $region8: #{tpu_custom_call.1} parent=1 // pred_region
      %s23 = ssub.s32 512, 512
      %24 = vsyncadd [#allocation6], %s23
      %s26 = sshll.u32 [#allocation5], 4
      %s27 = int_to_ptr.vmem [resolvable:$true] %s26
      %29 = dma.hbm_to_vmem [thread:$0]  %s1, 512, %s27, [#allocation6]
    $region9: #{tpu_custom_call.1} parent=1 // pred_fallthru
      _
    // Predicated region
    $region10: #{tpu_custom_call.1} parent=1 // pred_check
      _
    $region11: #{tpu_custom_call.1} parent=1 // pred_check_branch
      %31 = sbr.rel (0) target = $region13
    $region12: #{tpu_custom_call.1} parent=1 // pred_region
      %32 = dma.done [#allocation3], 512
    $region13: #{tpu_custom_call.1} parent=1 // pred_fallthru
      _
    // Predicated region
    $region14: #{tpu_custom_call.1} parent=1 // pred_check
      _
    $region15: #{tpu_custom_call.1} parent=1 // pred_check_branch
      %34 = sbr.rel (0) target = $region17
    $region16: #{tpu_custom_call.1} parent=1 // pred_region
      %35 = dma.done [#allocation6], 512
    $region17: #{tpu_custom_call.1} parent=1 // pred_fallthru
      _
    %v36 = vld [vmem:[#allocation2] sm:$0xff]
    %v37 = vld [vmem:[#allocation2 + $0x8] sm:$0xff]
    %v38 = vld [vmem:[#allocation2 + $0x10] sm:$0xff]
    %v39 = vld [vmem:[#allocation2 + $0x18] sm:$0xff]
    %v40 = vld [vmem:[#allocation5] sm:$0xff]
    %v41 = vld [vmem:[#allocation5 + $0x8] sm:$0xff]
    %v42 = vld [vmem:[#allocation5 + $0x10] sm:$0xff]
    %v43 = vld [vmem:[#allocation5 + $0x18] sm:$0xff]
    %v44 = vlog2.pop %v36
    %v45 = vmul.f32 %v44, 0.6931472
    %v46 = vlog2.pop %v37
    %v47 = vmul.f32 %v46, 0.6931472
    %v48 = vlog2.pop %v38
    %v49 = vmul.f32 %v48, 0.6931472
    %v50 = vlog2.pop %v39
    %v51 = vmul.f32 %v50, 0.6931472
    %v52 = vmax.f32 %v45, -100.0
    %v53 = vmax.f32 %v47, -100.0
    %v54 = vmax.f32 %v49, -100.0
    %v55 = vmax.f32 %v51, -100.0
    %v56 = vsub.f32 1.0, %v36
    %v57 = vsub.f32 1.0, %v37
    %v58 = vsub.f32 1.0, %v38
    %v59 = vsub.f32 1.0, %v39
    %v60 = vlog2.pop %v56
    %v61 = vmul.f32 %v60, 0.6931472
    %v62 = vlog2.pop %v57
    %v63 = vmul.f32 %v62, 0.6931472
    %v64 = vlog2.pop %v58
    %v65 = vmul.f32 %v64, 0.6931472
    %v66 = vlog2.pop %v59
    %v67 = vmul.f32 %v66, 0.6931472
    %v68 = vmax.f32 %v61, -100.0
    %v69 = vmax.f32 %v63, -100.0
    %v70 = vmax.f32 %v65, -100.0
    %v71 = vmax.f32 %v67, -100.0
    %v72 = vmul.f32 %v40, %v52
    %v73 = vmul.f32 %v41, %v53
    %v74 = vmul.f32 %v42, %v54
    %v75 = vmul.f32 %v43, %v55
    %v76 = vsub.f32 1.0, %v40
    %v77 = vsub.f32 1.0, %v41
    %v78 = vsub.f32 1.0, %v42
    %v79 = vsub.f32 1.0, %v43
    %v80 = vmul.f32 %v76, %v68
    %v81 = vmul.f32 %v77, %v69
    %v82 = vmul.f32 %v78, %v70
    %v83 = vmul.f32 %v79, %v71
    %v84 = vadd.f32 %v72, %v80
    %v85 = vadd.f32 %v73, %v81
    %v86 = vadd.f32 %v74, %v82
    %v87 = vadd.f32 %v75, %v83
    %v88 = vsub.f32 0.0, %v84
    %v89 = vsub.f32 0.0, %v85
    %v90 = vsub.f32 0.0, %v86
    %v91 = vsub.f32 0.0, %v87
    %v92 = vsub.f32 0.0, %v88
    %v93 = vsub.f32 0.0, %v89
    %v94 = vsub.f32 0.0, %v90
    %v95 = vsub.f32 0.0, %v91
    %v96 = vmul.f32 %v92, 1.442695
    %v97 = vpow.pop %v96
    %v98 = vmul.f32 %v93, 1.442695
    %v99 = vpow.pop %v98
    %v100 = vmul.f32 %v94, 1.442695
    %v101 = vpow.pop %v100
    %v102 = vmul.f32 %v95, 1.442695
    %v103 = vpow.pop %v102
    %v104 = vsub.f32 1.0, %v97
    %v105 = vsub.f32 1.0, %v99
    %v106 = vsub.f32 1.0, %v101
    %v107 = vsub.f32 1.0, %v103
    %v108 = vmul.f32 %v104, %v104
    %v109 = vmul.f32 %v105, %v105
    %v110 = vmul.f32 %v106, %v106
    %v111 = vmul.f32 %v107, %v107
    %v112 = vmul.f32 %v108, 0.25
    %v113 = vmul.f32 %v109, 0.25
    %v114 = vmul.f32 %v110, 0.25
    %v115 = vmul.f32 %v111, 0.25
    %v116 = vmul.f32 %v112, %v88
    %v117 = vmul.f32 %v113, %v89
    %v118 = vmul.f32 %v114, %v90
    %v119 = vmul.f32 %v115, %v91
    %v120 = vadd.f32 %v116, 0.0
    %v121 = vadd.f32 %v117, 0.0
    %v122 = vadd.f32 %v118, 0.0
    %v123 = vadd.f32 %v119, 0.0
    %124 = vst [vmem:[#allocation7] sm:$0xff] %v120
    %125 = vst [vmem:[#allocation7 + $0x8] sm:$0xff] %v121
    %126 = vst [vmem:[#allocation7 + $0x10] sm:$0xff] %v122
    %127 = vst [vmem:[#allocation7 + $0x18] sm:$0xff] %v123
    // Predicated region
    $region18: #{tpu_custom_call.1} parent=1 // pred_check
      _
    $region19: #{tpu_custom_call.1} parent=1 // pred_check_branch
      %129 = sbr.rel (0) target = $region21
    $region20: #{tpu_custom_call.1} parent=1 // pred_region
      %s131 = ssub.s32 512, 512
      %132 = vsyncadd [#allocation4], %s131
      %s134 = sshll.u32 [#allocation7], 4
      %s135 = int_to_ptr.vmem [resolvable:$true] %s134
      %137 = dma.vmem_to_hbm [thread:$0]  %s135, 512, %s2, [#allocation4]
    $region21: #{tpu_custom_call.1} parent=1 // pred_fallthru
      _
    // Predicated region
    $region22: #{tpu_custom_call.1} parent=1 // pred_check
      _
    $region23: #{tpu_custom_call.1} parent=1 // pred_check_branch
      %139 = sbr.rel (0) target = $region25
    $region24: #{tpu_custom_call.1} parent=1 // pred_region
      %140 = dma.done [#allocation4], 512
    $region25: #{tpu_custom_call.1} parent=1 // pred_fallthru
      _
    %141 = vsyncpa [#allocation3], 1
    %142 = vsyncpa [#allocation6], 1
    %143 = vsyncpa [#allocation4], 1

</llo_original>
